<compile_context>
chip_gen: v6e
topology: v6e:2x2x1
jax: 0.10.0
libtpu: 0.0.40
codegen_flags: <defaults>
</compile_context>

<pallas_src>
import functools
import math

import jax
import jax.numpy as jnp
from jax import lax
from jax.experimental import pallas as pl
from jax.experimental.pallas import tpu as pltpu


def _vmem_limit_bytes():
    """Scoped-VMEM budget: 75% of physical, capped, with a safe fallback."""
    try:
        cap = int(pltpu.get_tpu_info().vmem_capacity_bytes)
    except Exception:
        cap = 64 * 1024 * 1024
    return int(min(96 * 1024 * 1024, cap * 3 // 4))


def _round_up(n, m):
    return ((n + m - 1) // m) * m


def _pick_tile(n, preferred, align=128):
    """Largest divisor of n that is a multiple of `align` (then 128, then 8)
    and <= preferred; returns n itself if n <= preferred."""
    if n <= preferred:
        return n
    aligns = []
    for a in (align, 128, 8):
        if a not in aligns:
            aligns.append(a)
    for a in aligns:
        start = (preferred // a) * a
        for t in range(start, a - 1, -a):
            if t > 0 and n % t == 0:
                return t
    return n


# -----------------------------------------------------------------------------
# Kernel 1: exact path that also materializes the attention probabilities
# (required by the module's return signature).  Tiled over query rows.
# -----------------------------------------------------------------------------
def _sdpa_full_kernel(q_ref, k_ref, v_ref, out_ref, attn_ref, *,
                      scale, mm_dtype, valid_len):
    # Fold 1/sqrt(d) into q in f32 (so the scale is never rounded to bf16),
    # then cast to the MXU operand dtype.
    q = (q_ref[0].astype(jnp.float32) * scale).astype(mm_dtype)   # (Tq, D)
    k = k_ref[0].astype(mm_dtype)                                 # (Lp, D)
    v = v_ref[0].astype(mm_dtype)                                 # (Lp, D)

    # q @ k^T without materializing k.T: contract the last dims on the MXU.
    score = lax.dot_general(q, k, (((1,), (1,)), ((), ())),
                            preferred_element_type=jnp.float32)   # (Tq, Lp) f32

    if valid_len is not None:
        # Keys >= valid_len are zero-padding added by the wrapper: exclude.
        kpos = lax.broadcasted_iota(jnp.int32, score.shape, 1)
        score = jnp.where(kpos < valid_len, score, -1e30)

    # TODO(synk): optional `mask` argument (masked_fill(mask == 0, -10000)) is
    # not wired through; this kernel implements the mask=None forward path.

    m = jnp.max(score, axis=-1, keepdims=True)
    p = jnp.exp(score - m)
    denom = jnp.sum(p, axis=-1, keepdims=True)
    # Exact reciprocal: the normalized probabilities are a user-visible output.
    attn = p * pl.reciprocal(denom, approx=False)                 # (Tq, Lp) f32

    out = jnp.dot(attn.astype(mm_dtype), v,
                  preferred_element_type=jnp.float32)             # (Tq, D) f32

    attn_ref[0] = attn.astype(attn_ref.dtype)
    out_ref[0] = out.astype(out_ref.dtype)


# -----------------------------------------------------------------------------
# Kernel 2: flash-style online-softmax path (attention matrix never written).
# Grid = (major, minor, nk); kv axis is the innermost "arbitrary" reduction.
# -----------------------------------------------------------------------------
def _sdpa_flash_kernel(q_ref, k_ref, v_ref, out_ref, m_sc, l_sc, acc_sc, *,
                       scale, mm_dtype, valid_len, kv_tile):
    kv = pl.program_id(2)

    @pl.when(kv == 0)
    def _():
        m_sc[...] = jnp.full_like(m_sc, -jnp.inf)
        l_sc[...] = jnp.zeros_like(l_sc)
        acc_sc[...] = jnp.zeros_like(acc_sc)

    q = (q_ref[0].astype(jnp.float32) * scale).astype(mm_dtype)   # (Tq, D)
    k = k_ref[0].astype(mm_dtype)                                 # (Tk, D)
    v = v_ref[0].astype(mm_dtype)                                 # (Tk, D)

    s = lax.dot_general(q, k, (((1,), (1,)), ((), ())),
                        preferred_element_type=jnp.float32)       # (Tq, Tk) f32

    if valid_len is not None:
        kpos = kv * kv_tile + lax.broadcasted_iota(jnp.int32, s.shape, 1)
        s = jnp.where(kpos < valid_len, s, -1e30)

    m_prev = m_sc[...]
    m_new = jnp.maximum(m_prev, jnp.max(s, axis=-1, keepdims=True))
    alpha = jnp.exp(m_prev - m_new)
    p = jnp.exp(s - m_new)
    l_sc[...] = alpha * l_sc[...] + jnp.sum(p, axis=-1, keepdims=True)
    acc_sc[...] = alpha * acc_sc[...] + jnp.dot(
        p.astype(mm_dtype), v, preferred_element_type=jnp.float32)
    m_sc[...] = m_new

    @pl.when(kv == pl.num_programs(2) - 1)
    def _():
        out_ref[0] = (acc_sc[...] *
                      pl.reciprocal(l_sc[...], approx=True)).astype(out_ref.dtype)


# -----------------------------------------------------------------------------
# Wrapper
# -----------------------------------------------------------------------------
def scaled_dot_product_attention(q, k, v, mask=None, e=1e-12, *,
                                 return_attention=True,
                                 q_tile=256, kv_tile=512,
                                 bf16_matmul=None):
    """q, k, v: (B, H, L, D).

    return_attention=True  -> (attention_value, attention)   [module semantics]
    return_attention=False -> (attention_value, None)        [flash fast path]

    bf16_matmul: None (auto) uses bf16 MXU operands on the flash path and exact
    f32 matmuls on the attention-returning path; True/False forces both paths.
    """
    del e  # unused by the reference forward as well
    if mask is not None:
        # TODO(synk): masked_fill(mask == 0, -10000) path not implemented.
        raise NotImplementedError("mask is not supported by this kernel")

    B, H, L, D = q.shape
    assert k.shape == (B, H, L, D) and v.shape == (B, H, L, D)
    BH = B * H

    # Pad the sequence so every tile is (8,128)-aligned (lane-dense stores,
    # no masked vst.msk); padded key positions are masked out of the softmax.
    align = 128 if L >= 128 else 8
    Lp = _round_up(L, align)
    valid_len = None if Lp == L else L

    qf = q.reshape(BH, L, D)
    kf = k.reshape(BH, L, D)
    vf = v.reshape(BH, L, D)
    if Lp != L:
        pad = ((0, 0), (0, Lp - L), (0, 0))
        qf = jnp.pad(qf, pad)
        kf = jnp.pad(kf, pad)
        vf = jnp.pad(vf, pad)

    scale = 1.0 / math.sqrt(float(D))
    itemsize = jnp.dtype(q.dtype).itemsize
    compiler_params = dict(vmem_limit_bytes=_vmem_limit_bytes())

    if bf16_matmul is None:
        use_bf16_full, use_bf16_flash = False, True
    else:
        use_bf16_full = use_bf16_flash = bool(bf16_matmul)

    if return_attention:
        mm_dtype = jnp.bfloat16 if use_bf16_full else q.dtype
        tq = _pick_tile(Lp, q_tile, align=128)
        nq = Lp // tq

        # Keep BH leading: the full-length K/V block index is constant across
        # the inner q-tile axis, so K/V stay VMEM-resident per (batch*head).
        # Both axes are "parallel" so megacore can shard either.
        # TODO(synk): on v7x (48 MiB scoped budget) single-buffer the full-L
        # K/V blocks (pipeline_mode=pl.Buffered(1)) for very large L.
        q_spec = pl.BlockSpec((1, tq, D), lambda b, i: (b, i, 0))
        kv_full_spec = pl.BlockSpec((1, Lp, D), lambda b, i: (b, 0, 0))
        out_spec = pl.BlockSpec((1, tq, D), lambda b, i: (b, i, 0))
        attn_spec = pl.BlockSpec((1, tq, Lp), lambda b, i: (b, i, 0))

        cost = pl.CostEstimate(
            flops=4 * BH * Lp * Lp * D,
            transcendentals=BH * Lp * Lp,
            bytes_accessed=(4 * BH * Lp * D + BH * Lp * Lp) * itemsize,
        )

        out_flat, attn_flat = pl.pallas_call(
            functools.partial(_sdpa_full_kernel, scale=scale,
                              mm_dtype=mm_dtype, valid_len=valid_len),
            out_shape=(
                jax.ShapeDtypeStruct((BH, Lp, D), q.dtype),
                # TODO(synk): the attn output could be emitted in bf16 to halve
                # the L^2 HBM writeback; kept at q.dtype for module parity.
                jax.ShapeDtypeStruct((BH, Lp, Lp), q.dtype),
            ),
            grid_spec=pltpu.PrefetchScalarGridSpec(
                num_scalar_prefetch=0,
                grid=(BH, nq),
                in_specs=[q_spec, kv_full_spec, kv_full_spec],
                out_specs=[out_spec, attn_spec],
            ),
            compiler_params=pltpu.CompilerParams(
                dimension_semantics=("parallel", "parallel"),
                **compiler_params,
            ),
            cost_estimate=cost,
        )(qf, kf, vf)

        out = out_flat[:, :L, :].reshape(B, H, L, D)
        attn = attn_flat[:, :L, :L].reshape(B, H, L, L)
        return out, attn

    # Flash path: no (L, L) materialization, online softmax over kv tiles.
    mm_dtype = jnp.bfloat16 if use_bf16_flash else q.dtype
    tq = _pick_tile(Lp, q_tile, align=128)
    tk = _pick_tile(Lp, kv_tile, align=256)  # 256-wide N fills the v6e/v7x MXU
    nq = Lp // tq
    nk = Lp // tk

    # Put the larger independent axis first so megacore (v7x: 2 TCs) has an
    # even parallel extent to shard; the kv reduction axis stays innermost.
    if BH >= nq:
        grid = (BH, nq, nk)
        q_map = lambda b, i, j: (b, i, 0)
        kv_map = lambda b, i, j: (b, j, 0)
        o_map = lambda b, i, j: (b, i, 0)
    else:
        grid = (nq, BH, nk)
        q_map = lambda i, b, j: (b, i, 0)
        kv_map = lambda i, b, j: (b, j, 0)
        o_map = lambda i, b, j: (b, i, 0)

    cost = pl.CostEstimate(
        flops=4 * BH * Lp * Lp * D,
        transcendentals=BH * Lp * Lp,
        bytes_accessed=4 * BH * Lp * D * itemsize,
    )

    # TODO(synk): if a profile shows exposed K/V DMA at small BH, raise the
    # k/v pipeline depth with pipeline_mode=pl.Buffered(3).
    out_flat = pl.pallas_call(
        functools.partial(_sdpa_flash_kernel, scale=scale, mm_dtype=mm_dtype,
                          valid_len=valid_len, kv_tile=tk),
        out_shape=jax.ShapeDtypeStruct((BH, Lp, D), q.dtype),
        grid_spec=pltpu.PrefetchScalarGridSpec(
            num_scalar_prefetch=0,
            grid=grid,
            in_specs=[
                pl.BlockSpec((1, tq, D), q_map),
                pl.BlockSpec((1, tk, D), kv_map),
                pl.BlockSpec((1, tk, D), kv_map),
            ],
            out_specs=pl.BlockSpec((1, tq, D), o_map),
            scratch_shapes=[
                pltpu.VMEM((tq, 1), jnp.float32),   # running max m
                pltpu.VMEM((tq, 1), jnp.float32),   # running denom l
                pltpu.VMEM((tq, D), jnp.float32),   # output accumulator
            ],
        ),
        compiler_params=pltpu.CompilerParams(
            dimension_semantics=("parallel", "parallel", "arbitrary"),
            **compiler_params,
        ),
        cost_estimate=cost,
    )(qf, kf, vf)

    out = out_flat[:, :L, :].reshape(B, H, L, D)
    return out, None


# -----------------------------------------------------------------------------
# Pure-JAX reference (mirrors the PyTorch module with mask=None)
# -----------------------------------------------------------------------------
def _reference(q, k, v):
    d = q.shape[-1]
    score = jnp.einsum("bhld,bhmd->bhlm", q, k) / math.sqrt(float(d))
    attn = jax.nn.softmax(score, axis=-1)
    out = jnp.einsum("bhlm,bhmd->bhld", attn, v)
    return out, attn


if __name__ == "__main__":
    key = jax.random.PRNGKey(0)
    keys = jax.random.split(key, 9)

    # --- module-semantics path (returns both outputs, exact f32 scores) ------
    B, H, L, D = 2, 4, 8, 32
    q = jax.random.normal(keys[0], (B, H, L, D), dtype=jnp.float32)
    k = jax.random.normal(keys[1], (B, H, L, D), dtype=jnp.float32)
    v = jax.random.normal(keys[2], (B, H, L, D), dtype=jnp.float32)

    out, attn = scaled_dot_product_attention(q, k, v)
    jax.block_until_ready((out, attn))
    ref_out, ref_attn = _reference(q, k, v)
    assert jnp.allclose(out, ref_out, atol=1e-5, rtol=1e-5)
    assert jnp.allclose(attn, ref_attn, atol=1e-5, rtol=1e-5)

    # --- flash fast path (value only) -----------------------------------------
    B2, H2, L2, D2 = 1, 2, 256, 128
    q2 = jax.random.normal(keys[3], (B2, H2, L2, D2), dtype=jnp.float32)
    k2 = jax.random.normal(keys[4], (B2, H2, L2, D2), dtype=jnp.float32)
    v2 = jax.random.normal(keys[5], (B2, H2, L2, D2), dtype=jnp.float32)
    ref_out2, _ = _reference(q2, k2, v2)

    # Default: bf16 MXU operands, f32 softmax math + accumulation.
    out2, _ = scaled_dot_product_attention(q2, k2, v2, return_attention=False)
    jax.block_until_ready(out2)
    assert jnp.allclose(out2, ref_out2, atol=2e-2, rtol=2e-2)

    # Exact f32 matmuls on request.
    out2f, _ = scaled_dot_product_attention(q2, k2, v2, return_attention=False,
                                            bf16_matmul=False)
    jax.block_until_ready(out2f)
    assert jnp.allclose(out2f, ref_out2, atol=5e-3, rtol=5e-3)

    # --- ragged length (L not a multiple of 128): padded + key-masked --------
    B3, H3, L3, D3 = 1, 2, 200, 64
    q3 = jax.random.normal(keys[6], (B3, H3, L3, D3), dtype=jnp.float32)
    k3 = jax.random.normal(keys[7], (B3, H3, L3, D3), dtype=jnp.float32)
    v3 = jax.random.normal(keys[8], (B3, H3, L3, D3), dtype=jnp.float32)
    ref_out3, ref_attn3 = _reference(q3, k3, v3)

    out3, attn3 = scaled_dot_product_attention(q3, k3, v3)
    jax.block_until_ready((out3, attn3))
    assert jnp.allclose(out3, ref_out3, atol=1e-4, rtol=1e-4)
    assert jnp.allclose(attn3, ref_attn3, atol=1e-4, rtol=1e-4)

    out3f, _ = scaled_dot_product_attention(q3, k3, v3, return_attention=False)
    jax.block_until_ready(out3f)
    assert jnp.allclose(out3f, ref_out3, atol=2e-2, rtol=2e-2)

    print("KERNEL_OK")
</pallas_src>

<mosaic_0001>
module attributes {stable_mosaic.version = 11 : i64} {
  func.func @_sdpa_full_kernel(%arg0: i32, %arg1: i32, %arg2: memref<1x8x32xf32, #tpu.memory_space<vmem>>, %arg3: memref<1x8x32xf32, #tpu.memory_space<vmem>>, %arg4: memref<1x8x32xf32, #tpu.memory_space<vmem>>, %arg5: memref<1x8x32xf32, #tpu.memory_space<vmem>>, %arg6: memref<1x8x8xf32, #tpu.memory_space<vmem>>) attributes {dimension_semantics = [#tpu.dimension_semantics<parallel>, #tpu.dimension_semantics<parallel>], iteration_bounds = array<i64: 8, 1>, scalar_prefetch = 0 : i64, scratch_operands = 0 : i64, tpu.core_type = #tpu.core_type<tc>, window_params = [{transform_indices = @transform_0, window_bounds = array<i64: 1, 8, 32>}, {transform_indices = @transform_1, window_bounds = array<i64: 1, 8, 32>}, {transform_indices = @transform_2, window_bounds = array<i64: 1, 8, 32>}, {transform_indices = @transform_3, window_bounds = array<i64: 1, 8, 32>}, {transform_indices = @transform_4, window_bounds = array<i64: 1, 8, 8>}]} {
    %c0 = arith.constant 0 : index
    %c0_0 = arith.constant 0 : index
    %c0_1 = arith.constant 0 : index
    %0 = vector.load %arg2[%c0, %c0_0, %c0_1] : memref<1x8x32xf32, #tpu.memory_space<vmem>>, vector<1x8x32xf32>
    %1 = vector.shape_cast %0 : vector<1x8x32xf32> to vector<8x32xf32>
    %cst = arith.constant 0.176776692 : f32
    %2 = vector.broadcast %cst : f32 to vector<8x32xf32>
    %3 = arith.mulf %1, %2 : vector<8x32xf32>
    %c0_2 = arith.constant 0 : index
    %c0_3 = arith.constant 0 : index
    %c0_4 = arith.constant 0 : index
    %4 = vector.load %arg3[%c0_2, %c0_3, %c0_4] : memref<1x8x32xf32, #tpu.memory_space<vmem>>, vector<1x8x32xf32>
    %5 = vector.shape_cast %4 : vector<1x8x32xf32> to vector<8x32xf32>
    %c0_5 = arith.constant 0 : index
    %c0_6 = arith.constant 0 : index
    %c0_7 = arith.constant 0 : index
    %6 = vector.load %arg4[%c0_5, %c0_6, %c0_7] : memref<1x8x32xf32, #tpu.memory_space<vmem>>, vector<1x8x32xf32>
    %7 = vector.shape_cast %6 : vector<1x8x32xf32> to vector<8x32xf32>
    %cst_8 = arith.constant dense<0.000000e+00> : vector<8x8xf32>
    %8 = tpu.matmul %3, %5, %cst_8 {dimension_numbers = #tpu.dot_dimension_numbers<[1], [1], [0], [0], [0, 0, 1, 0], [], []>} : vector<8x32xf32>, vector<8x32xf32>, vector<8x8xf32> -> vector<8x8xf32>
    %cst_9 = arith.constant dense<0xFF800000> : vector<8xf32>
    %9 = vector.multi_reduction <maximumf>, %8, %cst_9 [1] : vector<8x8xf32> to vector<8xf32>
    %10 = vector.shape_cast %9 : vector<8xf32> to vector<8x1xf32>
    %11 = vector.broadcast %10 : vector<8x1xf32> to vector<8x8xf32>
    %12 = arith.subf %8, %11 : vector<8x8xf32>
    %13 = math.exp %12 : vector<8x8xf32>
    %cst_10 = arith.constant dense<0.000000e+00> : vector<8xf32>
    %14 = vector.multi_reduction <add>, %13, %cst_10 [1] : vector<8x8xf32> to vector<8xf32>
    %15 = vector.shape_cast %14 : vector<8xf32> to vector<8x1xf32>
    %16 = tpu.reciprocal %15 : vector<8x1xf32> -> vector<8x1xf32>
    %17 = vector.broadcast %16 : vector<8x1xf32> to vector<8x8xf32>
    %18 = arith.mulf %13, %17 : vector<8x8xf32>
    %cst_11 = arith.constant dense<0.000000e+00> : vector<8x32xf32>
    %19 = tpu.matmul %18, %7, %cst_11 {dimension_numbers = #tpu.dot_dimension_numbers<[1], [0], [0], [1], [0, 0, 1, 1], [], []>} : vector<8x8xf32>, vector<8x32xf32>, vector<8x32xf32> -> vector<8x32xf32>
    %c0_12 = arith.constant 0 : index
    %c0_13 = arith.constant 0 : index
    %c0_14 = arith.constant 0 : index
    %20 = vector.load %arg6[%c0_12, %c0_13, %c0_14] : memref<1x8x8xf32, #tpu.memory_space<vmem>>, vector<1x8x8xf32>
    %21 = vector.shape_cast %20 : vector<1x8x8xf32> to vector<8x8xf32>
    %22 = vector.shape_cast %18 : vector<8x8xf32> to vector<1x8x8xf32>
    tpu.vector_store %arg6[%c0_12, %c0_13, %c0_14], %22 {strides = array<i32>} : memref<1x8x8xf32, #tpu.memory_space<vmem>>, vector<1x8x8xf32>,
    %c0_15 = arith.constant 0 : index
    %c0_16 = arith.constant 0 : index
    %c0_17 = arith.constant 0 : index
    %23 = vector.load %arg5[%c0_15, %c0_16, %c0_17] : memref<1x8x32xf32, #tpu.memory_space<vmem>>, vector<1x8x32xf32>
    %24 = vector.shape_cast %23 : vector<1x8x32xf32> to vector<8x32xf32>
    %25 = vector.shape_cast %19 : vector<8x32xf32> to vector<1x8x32xf32>
    tpu.vector_store %arg5[%c0_15, %c0_16, %c0_17], %25 {strides = array<i32>} : memref<1x8x32xf32, #tpu.memory_space<vmem>>, vector<1x8x32xf32>,
    return
  }
  func.func @transform_0(%arg0: i32, %arg1: i32) -> (i32, i32, i32) {
    %c0_i32 = arith.constant 0 : i32
    %c0_i32_0 = arith.constant 0 : i32
    return %arg0, %arg1, %c0_i32 : i32, i32, i32
  }
  func.func @transform_1(%arg0: i32, %arg1: i32) -> (i32, i32, i32) {
    %c0_i32 = arith.constant 0 : i32
    %c0_i32_0 = arith.constant 0 : i32
    %c0_i32_1 = arith.constant 0 : i32
    return %arg0, %c0_i32, %c0_i32_0 : i32, i32, i32
  }
  func.func @transform_2(%arg0: i32, %arg1: i32) -> (i32, i32, i32) {
    %c0_i32 = arith.constant 0 : i32
    %c0_i32_0 = arith.constant 0 : i32
    %c0_i32_1 = arith.constant 0 : i32
    return %arg0, %c0_i32, %c0_i32_0 : i32, i32, i32
  }
  func.func @transform_3(%arg0: i32, %arg1: i32) -> (i32, i32, i32) {
    %c0_i32 = arith.constant 0 : i32
    %c0_i32_0 = arith.constant 0 : i32
    return %arg0, %arg1, %c0_i32 : i32, i32, i32
  }
  func.func @transform_4(%arg0: i32, %arg1: i32) -> (i32, i32, i32) {
    %c0_i32 = arith.constant 0 : i32
    %c0_i32_0 = arith.constant 0 : i32
    return %arg0, %arg1, %c0_i32 : i32, i32, i32
  }
}

</mosaic_0001>

<llo_original>
// kernel: tpu_custom_call.1
$region0: #{tpu_custom_call.1}
  #allocation0 [shape = 'u32[]', space=smem, size = 0x4, offset = 0x4, fixed_abs, tag = 'smem constant byte address 0x4 - core index']
  #allocation1 [shape = 'u32[144,128]{1,0:T(1,128)}', space=vmem, size = 0x12000, scoped, tag = 'internal scratch']
  %s0 = inlined_call_operand.hbm [shape: f32[8,8,32], index: 0, kind: input, shape index: {}]
  %s1 = inlined_call_operand.hbm [shape: f32[8,8,32], index: 1, kind: input, shape index: {}]
  %s2 = inlined_call_operand.hbm [shape: f32[8,8,32], index: 2, kind: input, shape index: {}]
  %s3 = inlined_call_operand.hbm [shape: f32[8,8,32], index: 3, kind: output, shape index: {0}]
  %s4 = inlined_call_operand.hbm [shape: f32[8,8,8], index: 4, kind: output, shape index: {1}]
  %5 = xla_tuple %s3, %s4
  %s6 = sld [smem:[#allocation0]]
  $region65: #{tpu_custom_call.1} parent=0
    _
  %s8 = ssub.s32 1, %s6
  %s9 = scalar_select 0, %s8, %s6
  $region1: #{tpu_custom_call.1} parent=0
    #allocation2 [shape = 'u8[8192]{0}', space=vmem, size = 0x2000, scoped, tag = 'input window, operand 0']
    #allocation3 [shape = 's32[2]{0}', space=sflag, size = 0x8, scoped, tag = 'scoped memory for tpu_custom_call.1']
    #allocation4 [shape = 's32[2]{0}', space=sflag, size = 0x8, scoped, tag = 'scoped memory for tpu_custom_call.1']
    #allocation5 [shape = 'u8[8192]{0}', space=vmem, size = 0x2000, scoped, tag = 'input window, operand 1']
    #allocation6 [shape = 's32[2]{0}', space=sflag, size = 0x8, scoped, tag = 'scoped memory for tpu_custom_call.1']
    #allocation7 [shape = 'u8[8192]{0}', space=vmem, size = 0x2000, scoped, tag = 'input window, operand 2']
    #allocation8 [shape = 'u8[8192]{0}', space=vmem, size = 0x2000, scoped, tag = 'output window, operand 0']
    #allocation9 [shape = 'u8[8192]{0}', space=vmem, size = 0x2000, scoped, tag = 'output window, operand 1']
    #allocation10 [shape = 's32[2]{0}', space=sflag, size = 0x8, scoped, tag = 'scoped memory for tpu_custom_call.1']
    %10 = vsyncpa [#allocation3], 0
    %s11 = scalar_lea.sflag [#allocation3], 1
    %12 = vsyncpa %s11, 0
    %13 = vsyncpa [#allocation6], 0
    %s14 = scalar_lea.sflag [#allocation6], 1
    %15 = vsyncpa %s14, 0
    %16 = vsyncpa [#allocation4], 0
    %s17 = scalar_lea.sflag [#allocation4], 1
    %18 = vsyncpa %s17, 0
    %19 = vsyncpa [#allocation10], 0
    %s20 = scalar_lea.sflag [#allocation10], 1
    %21 = vsyncpa %s20, 0
    loop: start=0, step=1, limit=10
    $region2: #{tpu_custom_call.1} parent=1 // loop_pre_header
      _
    $region3: #{tpu_custom_call.1} parent=1 // loop_header
      %s23 = sphi 0, %s27
      %p24 = scmp.ge.s32.totalorder %s23, 10
      %s30 = sphi 0, %s42
      %s31 = sphi 0, %s38
      %s32 = sphi 0, %s30
      %s33 = sphi 0, %s31
      %s34 = sphi 0, %s32
      %s35 = sphi 0, %s33
      %s47 = sphi 0, %s49
      %s50 = sphi 0, %s47
      %s51 = sphi 0, %s50
      %s67 = sphi 0, %s51
      %s73 = sphi 0, %s75
      %s76 = sphi 0, %s73
      %s77 = sphi 0, %s76
      %s93 = sphi 0, %s77
      %s99 = sphi 0, %s101
      %s102 = sphi 0, %s99
      %s103 = sphi 0, %s102
      %s119 = sphi 0, %s103
      %s127 = sphi 0, %s129
      %s130 = sphi 0, %s127
      %s131 = sphi 0, %s130
      %s147 = sphi 0, %s131
      %s155 = sphi 0, %s157
      %s158 = sphi 0, %s155
      %s159 = sphi 0, %s158
      %s175 = sphi 0, %s159
    $region4: #{tpu_custom_call.1} parent=1 // loop_header_branch
      %26 = sbr.rel (%p24) target = $region8
    $region5: #{tpu_custom_call.1} parent=1 // loop_body
      %s28 = ssub.s32 %s23, 1
      %s29 = ssub.s32 %s23, 2
      %s36 = sadd.s32 1, %s31
      %p37 = scmp.ge.s32.totalorder %s36, 1
      %s38 = scalar_select %p37, 0, %s36
      %s39 = sadd.s32 1, %s30
      %s40 = scalar_select %p37, %s39, %s30
      %p41 = scmp.ge.s32.totalorder %s40, 8
      %s42 = scalar_select %p41, 0, %s40
      %s43 = ssub.s32 %s30, %s42
      %s44 = ssub.s32 %s31, %s38
      %s45 = sor.u32 %s43, %s44
      %p46 = scmp.eq.s32.totalorder %s45, 0
      %s48 = sadd.s32 %s47, 1
      %s49 = scalar_select %p46, %s47, %s48
      %p52 = pneg %p46
      %p53 = scmp.eq.s32.totalorder %s23, 7
      %p54 = por %p52, %p53
      %p55 = scmp.ne.s32.totalorder %s47, %s50
      %p56 = scmp.eq.s32.totalorder %s23, 0
      %p57 = por %p55, %p56
      %p58 = scmp.ne.s32.totalorder %s47, %s50
      %p59 = scmp.eq.s32.totalorder %s28, 7
      %p60 = por %p58, %p59
      %p61 = scmp.ne.s32.totalorder %s50, %s51
      %p62 = scmp.eq.s32.totalorder %s28, 0
      %p63 = por %p61, %p62
      %p64 = scmp.ne.s32.totalorder %s50, %s51
      %p65 = scmp.eq.s32.totalorder %s29, 7
      %p66 = por %p64, %p65
      %p68 = scmp.ne.s32.totalorder %s51, %s67
      %p69 = scmp.eq.s32.totalorder %s29, 0
      %p70 = por %p68, %p69
      %s71 = ssub.s32 %s30, %s42
      %p72 = scmp.eq.s32.totalorder %s71, 0
      %s74 = sadd.s32 %s73, 1
      %s75 = scalar_select %p72, %s73, %s74
      %p78 = pneg %p72
      %p79 = scmp.eq.s32.totalorder %s23, 7
      %p80 = por %p78, %p79
      %p81 = scmp.ne.s32.totalorder %s73, %s76
      %p82 = scmp.eq.s32.totalorder %s23, 0
      %p83 = por %p81, %p82
      %p84 = scmp.ne.s32.totalorder %s73, %s76
      %p85 = scmp.eq.s32.totalorder %s28, 7
      %p86 = por %p84, %p85
      %p87 = scmp.ne.s32.totalorder %s76, %s77
      %p88 = scmp.eq.s32.totalorder %s28, 0
      %p89 = por %p87, %p88
      %p90 = scmp.ne.s32.totalorder %s76, %s77
      %p91 = scmp.eq.s32.totalorder %s29, 7
      %p92 = por %p90, %p91
      %p94 = scmp.ne.s32.totalorder %s77, %s93
      %p95 = scmp.eq.s32.totalorder %s29, 0
      %p96 = por %p94, %p95
      %s97 = ssub.s32 %s30, %s42
      %p98 = scmp.eq.s32.totalorder %s97, 0
      %s100 = sadd.s32 %s99, 1
      %s101 = scalar_select %p98, %s99, %s100
      %p104 = pneg %p98
      %p105 = scmp.eq.s32.totalorder %s23, 7
      %p106 = por %p104, %p105
      %p107 = scmp.ne.s32.totalorder %s99, %s102
      %p108 = scmp.eq.s32.totalorder %s23, 0
      %p109 = por %p107, %p108
      %p110 = scmp.ne.s32.totalorder %s99, %s102
      %p111 = scmp.eq.s32.totalorder %s28, 7
      %p112 = por %p110, %p111
      %p113 = scmp.ne.s32.totalorder %s102, %s103
      %p114 = scmp.eq.s32.totalorder %s28, 0
      %p115 = por %p113, %p114
      %p116 = scmp.ne.s32.totalorder %s102, %s103
      %p117 = scmp.eq.s32.totalorder %s29, 7
      %p118 = por %p116, %p117
      %p120 = scmp.ne.s32.totalorder %s103, %s119
      %p121 = scmp.eq.s32.totalorder %s29, 0
      %p122 = por %p120, %p121
      %s123 = ssub.s32 %s30, %s42
      %s124 = ssub.s32 %s31, %s38
      %s125 = sor.u32 %s123, %s124
      %p126 = scmp.eq.s32.totalorder %s125, 0
      %s128 = sadd.s32 %s127, 1
      %s129 = scalar_select %p126, %s127, %s128
      %p132 = pneg %p126
      %p133 = scmp.eq.s32.totalorder %s23, 7
      %p134 = por %p132, %p133
      %p135 = scmp.ne.s32.totalorder %s127, %s130
      %p136 = scmp.eq.s32.totalorder %s23, 0
      %p137 = por %p135, %p136
      %p138 = scmp.ne.s32.totalorder %s127, %s130
      %p139 = scmp.eq.s32.totalorder %s28, 7
      %p140 = por %p138, %p139
      %p141 = scmp.ne.s32.totalorder %s130, %s131
      %p142 = scmp.eq.s32.totalorder %s28, 0
      %p143 = por %p141, %p142
      %p144 = scmp.ne.s32.totalorder %s130, %s131
      %p145 = scmp.eq.s32.totalorder %s29, 7
      %p146 = por %p144, %p145
      %p148 = scmp.ne.s32.totalorder %s131, %s147
      %p149 = scmp.eq.s32.totalorder %s29, 0
      %p150 = por %p148, %p149
      %s151 = ssub.s32 %s30, %s42
      %s152 = ssub.s32 %s31, %s38
      %s153 = sor.u32 %s151, %s152
      %p154 = scmp.eq.s32.totalorder %s153, 0
      %s156 = sadd.s32 %s155, 1
      %s157 = scalar_select %p154, %s155, %s156
      %p160 = pneg %p154
      %p161 = scmp.eq.s32.totalorder %s23, 7
      %p162 = por %p160, %p161
      %p163 = scmp.ne.s32.totalorder %s155, %s158
      %p164 = scmp.eq.s32.totalorder %s23, 0
      %p165 = por %p163, %p164
      %p166 = scmp.ne.s32.totalorder %s155, %s158
      %p167 = scmp.eq.s32.totalorder %s28, 7
      %p168 = por %p166, %p167
      %p169 = scmp.ne.s32.totalorder %s158, %s159
      %p170 = scmp.eq.s32.totalorder %s28, 0
      %p171 = por %p169, %p170
      %p172 = scmp.ne.s32.totalorder %s158, %s159
      %p173 = scmp.eq.s32.totalorder %s29, 7
      %p174 = por %p172, %p173
      %p176 = scmp.ne.s32.totalorder %s159, %s175
      %p177 = scmp.eq.s32.totalorder %s29, 0
      %p178 = por %p176, %p177
      %p179 = scmp.le.s32.totalorder 1, %s23
      %p180 = scmp.lt.s32.totalorder %s23, 9
      %p181 = pnand %p179, %p180
      %p182 = pneg %p181
      // Predicated region
      $region9: #{tpu_custom_call.1} parent=5 // pred_check
        _
      $region10: #{tpu_custom_call.1} parent=5 // pred_check_branch
        %184 = sbr.rel (%p181) target = $region12
      $region11: #{tpu_custom_call.1} parent=5 // pred_region
        %s185 = ssub.s32 %s23, 1
      $region12: #{tpu_custom_call.1} parent=5 // pred_fallthru
        _
      %p186 = scmp.lt.s32.totalorder %s23, 8
      // Predicated region
      $region13: #{tpu_custom_call.1} parent=5 // pred_check
        %p187 = pneg %p186
      $region14: #{tpu_custom_call.1} parent=5 // pred_check_branch
        %189 = sbr.rel (%p187) target = $region16
      $region15: #{tpu_custom_call.1} parent=5 // pred_region
        // Predicated region
        $region17: #{tpu_custom_call.1} parent=15 // pred_check
          %p190 = pneg %p57
        $region18: #{tpu_custom_call.1} parent=15 // pred_check_branch
          %192 = sbr.rel (%p190) target = $region20
        $region19: #{tpu_custom_call.1} parent=15 // pred_region
          %s193 = sand.u32 %s47, 1
          %s194 = scalar_lea.sflag [#allocation3], %s193
          %s195 = sand.u32 %s47, 1
          %s196 = smul.addr %s195, 8
          %s197 = scalar_lea.vmem [#allocation2], %s196
          %s199 = ssub.s32 128, 128
          %200 = vsyncadd %s194, %s199
          %s201 = sadd.s32 %s31, %s30
          %s202 = smul.addr %s201, 128
          %s203 = scalar_lea.hbm %s0, %s202
          %s205 = sshll.u32 %s197, 4
          %s206 = int_to_ptr.vmem [resolvable:$true] %s205
          %208 = dma.hbm_to_vmem [thread:$0]  %s203, 128, %s206, %s194
        $region20: #{tpu_custom_call.1} parent=15 // pred_fallthru
          _
        // Predicated region
        $region21: #{tpu_custom_call.1} parent=15 // pred_check
          %p209 = pneg %p83
        $region22: #{tpu_custom_call.1} parent=15 // pred_check_branch
          %211 = sbr.rel (%p209) target = $region24
        $region23: #{tpu_custom_call.1} parent=15 // pred_region
          %s212 = sand.u32 %s23, 1
          %s213 = scalar_lea.sflag [#allocation6], %s212
          %s214 = sand.u32 %s73, 1
          %s215 = smul.addr %s214, 8
          %s216 = scalar_lea.vmem [#allocation5], %s215
          %s218 = ssub.s32 128, 128
          %219 = vsyncadd %s213, %s218
          %s220 = smul.addr %s30, 128
          %s221 = scalar_lea.hbm %s1, %s220
          %s223 = sshll.u32 %s216, 4
          %s224 = int_to_ptr.vmem [resolvable:$true] %s223
          %226 = dma.hbm_to_vmem [thread:$0]  %s221, 128, %s224, %s213
        $region24: #{tpu_custom_call.1} parent=15 // pred_fallthru
          _
        // Predicated region
        $region25: #{tpu_custom_call.1} parent=15 // pred_check
          %p227 = pneg %p109
        $region26: #{tpu_custom_call.1} parent=15 // pred_check_branch
          %229 = sbr.rel (%p227) target = $region28
        $region27: #{tpu_custom_call.1} parent=15 // pred_region
          %s230 = sand.u32 %s23, 1
          %s231 = scalar_lea.sflag [#allocation6], %s230
          %s232 = sand.u32 %s99, 1
          %s233 = smul.addr %s232, 8
          %s234 = scalar_lea.vmem [#allocation7], %s233
          %s236 = ssub.s32 128, 128
          %237 = vsyncadd %s231, %s236
          %s238 = smul.addr %s30, 128
          %s239 = scalar_lea.hbm %s2, %s238
          %s241 = sshll.u32 %s234, 4
          %s242 = int_to_ptr.vmem [resolvable:$true] %s241
          %244 = dma.hbm_to_vmem [thread:$0]  %s239, 128, %s242, %s231
        $region28: #{tpu_custom_call.1} parent=15 // pred_fallthru
          _
      $region16: #{tpu_custom_call.1} parent=5 // pred_fallthru
        _
      %p245 = scmp.le.s32.totalorder 1, %s23
      %p246 = scmp.lt.s32.totalorder %s23, 9
      %p247 = pnand %p245, %p246
      %p248 = pneg %p247
      // Predicated region
      $region29: #{tpu_custom_call.1} parent=5 // pred_check
        _
      $region30: #{tpu_custom_call.1} parent=5 // pred_check_branch
        %250 = sbr.rel (%p247) target = $region32
      $region31: #{tpu_custom_call.1} parent=5 // pred_region
        %s251 = ssub.s32 %s23, 1
        %s252 = sand.u32 %s50, 1
        %s253 = scalar_lea.sflag [#allocation3], %s252
        %s254 = sand.u32 %s50, 1
        %s255 = smul.addr %s254, 8
        %s256 = scalar_lea.vmem [#allocation2], %s255
        // Predicated region
        $region33: #{tpu_custom_call.1} parent=31 // pred_check
          %p257 = pneg %p63
        $region34: #{tpu_custom_call.1} parent=31 // pred_check_branch
          %259 = sbr.rel (%p257) target = $region36
        $region35: #{tpu_custom_call.1} parent=31 // pred_region
          %260 = dma.done %s253, 128
        $region36: #{tpu_custom_call.1} parent=31 // pred_fallthru
          _
        %s261 = sand.u32 %s28, 1
        %s262 = scalar_lea.sflag [#allocation6], %s261
        %s263 = sand.u32 %s76, 1
        %s264 = smul.addr %s263, 8
        %s265 = scalar_lea.vmem [#allocation5], %s264
        // Predicated region
        $region37: #{tpu_custom_call.1} parent=31 // pred_check
          %p266 = pneg %p89
        $region38: #{tpu_custom_call.1} parent=31 // pred_check_branch
          %268 = sbr.rel (%p266) target = $region40
        $region39: #{tpu_custom_call.1} parent=31 // pred_region
          %269 = dma.done %s262, 128
        $region40: #{tpu_custom_call.1} parent=31 // pred_fallthru
          _
        %s270 = sand.u32 %s28, 1
        %s271 = scalar_lea.sflag [#allocation6], %s270
        %s272 = sand.u32 %s102, 1
        %s273 = smul.addr %s272, 8
        %s274 = scalar_lea.vmem [#allocation7], %s273
        // Predicated region
        $region41: #{tpu_custom_call.1} parent=31 // pred_check
          %p275 = pneg %p115
        $region42: #{tpu_custom_call.1} parent=31 // pred_check_branch
          %277 = sbr.rel (%p275) target = $region44
        $region43: #{tpu_custom_call.1} parent=31 // pred_region
          %278 = dma.done %s271, 128
        $region44: #{tpu_custom_call.1} parent=31 // pred_fallthru
          _
        %s279 = sand.u32 %s50, 1
        %s280 = scalar_lea.sflag [#allocation3], %s279
        %s281 = sand.u32 %s50, 1
        %s282 = smul.addr %s281, 8
        %s283 = scalar_lea.vmem [#allocation2], %s282
        %p284 = pneg %p63
        %p285 = pneg %p60
        %s286 = sand.u32 %s28, 1
        %s287 = scalar_lea.sflag [#allocation6], %s286
        %s288 = sand.u32 %s76, 1
        %s289 = smul.addr %s288, 8
        %s290 = scalar_lea.vmem [#allocation5], %s289
        %p291 = pneg %p89
        %p292 = pneg %p86
        %s293 = sand.u32 %s28, 1
        %s294 = scalar_lea.sflag [#allocation6], %s293
        %s295 = sand.u32 %s102, 1
        %s296 = smul.addr %s295, 8
        %s297 = scalar_lea.vmem [#allocation7], %s296
        %p298 = pneg %p115
        %p299 = pneg %p112
        %p300 = pneg %p143
        %p301 = pneg %p140
        %s302 = sand.u32 %s130, 1
        %s303 = scalar_lea.sflag [#allocation4], %s302
        %s304 = sand.u32 %s130, 1
        %s305 = smul.addr %s304, 8
        %s306 = scalar_lea.vmem [#allocation8], %s305
        %p307 = pneg %p171
        %p308 = pneg %p168
        %s309 = sand.u32 %s158, 1
        %s310 = scalar_lea.sflag [#allocation10], %s309
        %s311 = sand.u32 %s158, 1
        %s312 = smul.addr %s311, 8
        %s313 = scalar_lea.vmem [#allocation9], %s312
        %v314 = vld [vmem:[%s256] sm:$0xff]
        %v315 = vmul.f32 %v314, 0.17677669
        %v316 = vld [vmem:[%s265] sm:$0xff]
        %v317 = vld [vmem:[%s274] sm:$0xff]
        %vm318 = vcmask 261120
        %v320 = vsel %vm318, %v315, 0
        %v323 = vsel %vm318, %v316, 0
        %325 = vmatprep.subr.mxu0 0.0
        %326 = vmatpush1.xpose.msra.mxu0 0.0
        %327 = vmatprep.subr.mxu0 0.0
        %328 = vmatpush1.xpose.msra.mxu0 0.0
        %329 = vmatprep.subr.mxu0 0.0
        %330 = vmatpush1.xpose.msra.mxu0 0.0
        %331 = vmatprep.subr.mxu0 0.0
        %332 = vmatpush1.xpose.msra.mxu0 0.0
        %333 = vmatprep.subr.mxu0 0.0
        %334 = vmatpush1.xpose.msra.mxu0 0.0
        %335 = vmatprep.subr.mxu0 0.0
        %336 = vmatpush1.xpose.msra.mxu0 0.0
        %337 = vmatprep.subr.mxu0 0.0
        %338 = vmatpush1.xpose.msra.mxu0 0.0
        %339 = vmatprep.subr.mxu0 0.0
        %340 = vmatpush1.xpose.msra.mxu0 0.0
        %341 = vmatprep.subr.mxu0 0.0
        %342 = vmatpush1.xpose.msra.mxu0 0.0
        %343 = vmatprep.subr.mxu0 0.0
        %344 = vmatpush1.xpose.msra.mxu0 0.0
        %345 = vmatprep.subr.mxu0 0.0
        %346 = vmatpush1.xpose.msra.mxu0 0.0
        %347 = vmatprep.subr.mxu0 0.0
        %348 = vmatpush1.xpose.msra.mxu0 0.0
        %349 = vmatprep.subr.mxu0 0.0
        %350 = vmatpush1.xpose.msra.mxu0 0.0
        %351 = vmatprep.subr.mxu0 0.0
        %352 = vmatpush1.xpose.msra.mxu0 0.0
        %353 = vmatprep.subr.mxu0 0.0
        %354 = vmatpush1.xpose.msra.mxu0 0.0
        %355 = vmatprep.subr.mxu0 0.0
        %356 = vmatpush1.xpose.msra.mxu0 %v323
        %357 = vmatprep.subr.mxu0 0.0
        %358 = vmatpush2.xpose.msra.mxu0 0.0
        %359 = vmatprep.subr.mxu0 0.0
        %360 = vmatpush2.xpose.msra.mxu0 0.0
        %361 = vmatprep.subr.mxu0 0.0
        %362 = vmatpush2.xpose.msra.mxu0 0.0
        %363 = vmatprep.subr.mxu0 0.0
        %364 = vmatpush2.xpose.msra.mxu0 0.0
        %365 = vmatprep.subr.mxu0 0.0
        %366 = vmatpush2.xpose.msra.mxu0 0.0
        %367 = vmatprep.subr.mxu0 0.0
        %368 = vmatpush2.xpose.msra.mxu0 0.0
        %369 = vmatprep.subr.mxu0 0.0
        %370 = vmatpush2.xpose.msra.mxu0 0.0
        %371 = vmatprep.subr.mxu0 0.0
        %372 = vmatpush2.xpose.msra.mxu0 0.0
        %373 = vmatprep.subr.mxu0 0.0
        %374 = vmatpush2.xpose.msra.mxu0 0.0
        %375 = vmatprep.subr.mxu0 0.0
        %376 = vmatpush2.xpose.msra.mxu0 0.0
        %377 = vmatprep.subr.mxu0 0.0
        %378 = vmatpush2.xpose.msra.mxu0 0.0
        %379 = vmatprep.subr.mxu0 0.0
        %380 = vmatpush2.xpose.msra.mxu0 0.0
        %381 = vmatprep.subr.mxu0 0.0
        %382 = vmatpush2.xpose.msra.mxu0 0.0
        %383 = vmatprep.subr.mxu0 0.0
        %384 = vmatpush2.xpose.msra.mxu0 0.0
        %385 = vmatprep.subr.mxu0 0.0
        %386 = vmatpush2.xpose.msra.mxu0 0.0
        %387 = vmatprep.subr.mxu0 0.0
        %388 = vmatpush2.xpose.msra.mxu0 0.0
        %389 = vmatprep.mubr.f32.mxu0 0.0
        %390 = vmatmul.mubr.f32.gmra.mxu0 %v320
        %v391 = vpop.f32.mrf.mxu0
        %v392 = vadd.f32 0.0, %v391
        %v393 = vpop.f32.mrf.mxu0
        %394 = vdwg.mxu0
        %vm395 = vcmask 64512
        %v396 = vsel %vm395, %v392, -inf
        %397 = vmax.xlane.f32.xlu0 %v396
        %v398 = vpop.xlane.xlu0 %397
        %v399 = vsub.f32 %v392, %v398
        %v400 = vmul.f32 %v399, 1.442695
        %v401 = vpow.pop %v400
        %v402 = vsel %vm395, %v401, 0.0
        %403 = vadd.xlane.f32.xlu0 %v402
        %v404 = vpop.xlane.xlu0 %403
        %v405 = vrcp.pop %v404
        %v406 = vmul.f32 %v401, %v405
        %v408 = vsel %vm395, %v406, 0
        %410 = vmatprep.subr.mxu0 0.0
        %411 = vmatpush1.msra.mxu0 0.0
        %412 = vmatprep.subr.mxu0 0.0
        %413 = vmatpush1.msra.mxu0 0.0
        %414 = vmatprep.subr.mxu0 0.0
        %415 = vmatpush1.msra.mxu0 0.0
        %416 = vmatprep.subr.mxu0 0.0
        %417 = vmatpush1.msra.mxu0 0.0
        %418 = vmatprep.subr.mxu0 0.0
        %419 = vmatpush1.msra.mxu0 0.0
        %420 = vmatprep.subr.mxu0 0.0
        %421 = vmatpush1.msra.mxu0 0.0
        %422 = vmatprep.subr.mxu0 0.0
        %423 = vmatpush1.msra.mxu0 0.0
        %424 = vmatprep.subr.mxu0 0.0
        %425 = vmatpush1.msra.mxu0 0.0
        %426 = vmatprep.subr.mxu0 0.0
        %427 = vmatpush1.msra.mxu0 0.0
        %428 = vmatprep.subr.mxu0 0.0
        %429 = vmatpush1.msra.mxu0 0.0
        %430 = vmatprep.subr.mxu0 0.0
        %431 = vmatpush1.msra.mxu0 0.0
        %432 = vmatprep.subr.mxu0 0.0
        %433 = vmatpush1.msra.mxu0 0.0
        %434 = vmatprep.subr.mxu0 0.0
        %435 = vmatpush1.msra.mxu0 0.0
        %436 = vmatprep.subr.mxu0 0.0
        %437 = vmatpush1.msra.mxu0 0.0
        %438 = vmatprep.subr.mxu0 0.0
        %439 = vmatpush1.msra.mxu0 0.0
        %440 = vmatprep.subr.mxu0 0.0
        %441 = vmatpush1.msra.mxu0 %v317
        %442 = vmatprep.subr.mxu0 0.0
        %443 = vmatpush2.msra.mxu0 0.0
        %444 = vmatprep.subr.mxu0 0.0
        %445 = vmatpush2.msra.mxu0 0.0
        %446 = vmatprep.subr.mxu0 0.0
        %447 = vmatpush2.msra.mxu0 0.0
        %448 = vmatprep.subr.mxu0 0.0
        %449 = vmatpush2.msra.mxu0 0.0
        %450 = vmatprep.subr.mxu0 0.0
        %451 = vmatpush2.msra.mxu0 0.0
        %452 = vmatprep.subr.mxu0 0.0
        %453 = vmatpush2.msra.mxu0 0.0
        %454 = vmatprep.subr.mxu0 0.0
        %455 = vmatpush2.msra.mxu0 0.0
        %456 = vmatprep.subr.mxu0 0.0
        %457 = vmatpush2.msra.mxu0 0.0
        %458 = vmatprep.subr.mxu0 0.0
        %459 = vmatpush2.msra.mxu0 0.0
        %460 = vmatprep.subr.mxu0 0.0
        %461 = vmatpush2.msra.mxu0 0.0
        %462 = vmatprep.subr.mxu0 0.0
        %463 = vmatpush2.msra.mxu0 0.0
        %464 = vmatprep.subr.mxu0 0.0
        %465 = vmatpush2.msra.mxu0 0.0
        %466 = vmatprep.subr.mxu0 0.0
        %467 = vmatpush2.msra.mxu0 0.0
        %468 = vmatprep.subr.mxu0 0.0
        %469 = vmatpush2.msra.mxu0 0.0
        %470 = vmatprep.subr.mxu0 0.0
        %471 = vmatpush2.msra.mxu0 0.0
        %472 = vmatprep.subr.mxu0 0.0
        %473 = vmatpush2.msra.mxu0 0.0
        %474 = vmatprep.mubr.f32.mxu0 0.0
        %475 = vmatmul.mubr.f32.gmra.mxu0 %v408
        %v476 = vpop.f32.mrf.mxu0
        %v477 = vadd.f32 0.0, %v476
        %v478 = vpop.f32.mrf.mxu0
        %479 = vdwg.mxu0
        %480 = vst.msk [vmem:[%s313] sm:$0xff] %vm395, %v406
        %481 = vst.msk [vmem:[%s306] sm:$0xff] %vm318, %v477
        %s482 = sand.u32 %s130, 1
        %s483 = scalar_lea.sflag [#allocation4], %s482
        %s484 = sand.u32 %s130, 1
        %s485 = smul.addr %s484, 8
        %s486 = scalar_lea.vmem [#allocation8], %s485
        %s487 = sand.u32 %s158, 1
        %s488 = scalar_lea.sflag [#allocation10], %s487
        %s489 = sand.u32 %s158, 1
        %s490 = smul.addr %s489, 8
        %s491 = scalar_lea.vmem [#allocation9], %s490
        // Predicated region
        $region45: #{tpu_custom_call.1} parent=31 // pred_check
          %p492 = pneg %p140
        $region46: #{tpu_custom_call.1} parent=31 // pred_check_branch
          %494 = sbr.rel (%p492) target = $region48
        $region47: #{tpu_custom_call.1} parent=31 // pred_region
          %s496 = ssub.s32 128, 128
          %497 = vsyncadd %s483, %s496
          %s498 = sadd.s32 %s33, %s32
          %s499 = smul.addr %s498, 128
          %s500 = scalar_lea.hbm %s3, %s499
          %s502 = sshll.u32 %s486, 4
          %s503 = int_to_ptr.vmem [resolvable:$true] %s502
          %505 = dma.vmem_to_hbm [thread:$0]  %s503, 128, %s500, %s483
        $region48: #{tpu_custom_call.1} parent=31 // pred_fallthru
          _
        // Predicated region
        $region49: #{tpu_custom_call.1} parent=31 // pred_check
          %p506 = pneg %p168
        $region50: #{tpu_custom_call.1} parent=31 // pred_check_branch
          %508 = sbr.rel (%p506) target = $region52
        $region51: #{tpu_custom_call.1} parent=31 // pred_region
          %s510 = ssub.s32 128, 128
          %511 = vsyncadd %s488, %s510
          %s512 = sadd.s32 %s33, %s32
          %s513 = smul.addr %s512, 128
          %s514 = scalar_lea.hbm %s4, %s513
          %s516 = sshll.u32 %s491, 4
          %s517 = int_to_ptr.vmem [resolvable:$true] %s516
          %519 = dma.vmem_to_hbm [thread:$0]  %s517, 128, %s514, %s488
        $region52: #{tpu_custom_call.1} parent=31 // pred_fallthru
          _
      $region32: #{tpu_custom_call.1} parent=5 // pred_fallthru
        _
      %p520 = scmp.le.s32.totalorder 2, %s23
      // Predicated region
      $region53: #{tpu_custom_call.1} parent=5 // pred_check
        %p521 = pneg %p520
      $region54: #{tpu_custom_call.1} parent=5 // pred_check_branch
        %523 = sbr.rel (%p521) target = $region56
      $region55: #{tpu_custom_call.1} parent=5 // pred_region
        %s524 = ssub.s32 %s23, 2
        // Predicated region
        $region57: #{tpu_custom_call.1} parent=55 // pred_check
          %p525 = pneg %p146
        $region58: #{tpu_custom_call.1} parent=55 // pred_check_branch
          %527 = sbr.rel (%p525) target = $region60
        $region59: #{tpu_custom_call.1} parent=55 // pred_region
          %s528 = sand.u32 %s131, 1
          %s529 = scalar_lea.sflag [#allocation4], %s528
          %s530 = sand.u32 %s131, 1
          %s531 = smul.addr %s530, 8
          %s532 = scalar_lea.vmem [#allocation8], %s531
          %533 = dma.done %s529, 128
        $region60: #{tpu_custom_call.1} parent=55 // pred_fallthru
          _
        // Predicated region
        $region61: #{tpu_custom_call.1} parent=55 // pred_check
          %p534 = pneg %p174
        $region62: #{tpu_custom_call.1} parent=55 // pred_check_branch
          %536 = sbr.rel (%p534) target = $region64
        $region63: #{tpu_custom_call.1} parent=55 // pred_region
          %s537 = sand.u32 %s159, 1
          %s538 = scalar_lea.sflag [#allocation10], %s537
          %s539 = sand.u32 %s159, 1
          %s540 = smul.addr %s539, 8
          %s541 = scalar_lea.vmem [#allocation9], %s540
          %542 = dma.done %s538, 128
        $region64: #{tpu_custom_call.1} parent=55 // pred_fallthru
          _
      $region56: #{tpu_custom_call.1} parent=5 // pred_fallthru
        _
    $region6: #{tpu_custom_call.1} parent=1 // loop_footer
      %s27 = sadd.s32 1, %s23
    $region7: #{tpu_custom_call.1} parent=1 // loop_footer_branch
      %22 = sbr.rel target = $region3
    $region8: #{tpu_custom_call.1} parent=1 // loop_exit
      _
    %543 = vsyncpa [#allocation3], 1
    %s544 = scalar_lea.sflag [#allocation3], 1
    %545 = vsyncpa %s544, 1
    %546 = vsyncpa [#allocation6], 1
    %s547 = scalar_lea.sflag [#allocation6], 1
    %548 = vsyncpa %s547, 1
    %549 = vsyncpa [#allocation4], 1
    %s550 = scalar_lea.sflag [#allocation4], 1
    %551 = vsyncpa %s550, 1
    %552 = vsyncpa [#allocation10], 1
    %s553 = scalar_lea.sflag [#allocation10], 1
    %554 = vsyncpa %s553, 1

</llo_original>
